<compile_context>
chip_gen: v7x
topology: tpu7x:2x2x1
jax: 0.10.0
libtpu: 0.0.40
codegen_flags: <defaults>
</compile_context>

<pallas_src>
import functools

import jax
import jax.numpy as jnp
from jax.experimental import pallas as pl
from jax.experimental.pallas import tpu as pltpu  # noqa: F401  (TPU backend)


def _deepset_fused_kernel(
    x_ref, y_ref,
    eq_alpha_ref, eq_beta_ref, eq_bias_ref,
    inv_beta_ref, inv_bias_ref,
    w1z_ref, w1y_ref, b1_ref, g1_ref, be1_ref, rm1_ref, rv1_ref,
    w2_ref, b2_ref, g2_ref, be2_ref, rm2_ref, rv2_ref,
    w3_ref, b3_ref,
    o_ref, *, eps):
    f32 = jnp.float32

    # ---- set encoder ------------------------------------------------------
    x = x_ref[...]                                        # (B, M) set of scalars
    inv_m = f32(1.0 / x.shape[1])
    xbar = jnp.sum(x, axis=1, keepdims=True) * inv_m      # (B, 1) mean over the set

    # EquivLinear(1, h0) is immediately followed by InvLinear's mean reduction
    # (no nonlinearity in between in the module's forward -- the ReLU member is
    # never used), so only the mean of the equivariant output is needed:
    #   mean_i H[b, i, :] = xbar_b * (alpha + beta) + bias_e
    h_mean = xbar * (eq_alpha_ref[...] + eq_beta_ref[...]) + eq_bias_ref[...]   # (B, h0)
    z = (jnp.dot(h_mean, inv_beta_ref[...], preferred_element_type=f32)
         + inv_bias_ref[...])                                                   # (B, h1)

    # ---- classifier block 1: Linear(+hstack) -> BN(eval) -> ReLU -> Dropout(id)
    u1 = (jnp.dot(z, w1z_ref[...], preferred_element_type=f32)
          + jnp.dot(y_ref[...], w1y_ref[...], preferred_element_type=f32)
          + b1_ref[...])
    s1 = g1_ref[...] * jax.lax.rsqrt(rv1_ref[...] + eps)
    a1 = jnp.maximum((u1 - rm1_ref[...]) * s1 + be1_ref[...], 0.0)

    # ---- classifier block 2 ------------------------------------------------
    u2 = jnp.dot(a1, w2_ref[...], preferred_element_type=f32) + b2_ref[...]
    s2 = g2_ref[...] * jax.lax.rsqrt(rv2_ref[...] + eps)
    a2 = jnp.maximum((u2 - rm2_ref[...]) * s2 + be2_ref[...], 0.0)

    # ---- final Linear (output padded to 128 lanes -> unmasked store) -------
    o_ref[...] = (jnp.dot(a2, w3_ref[...], preferred_element_type=f32)
                  + b3_ref[...]).astype(o_ref.dtype)


@functools.partial(jax.jit, static_argnames=("out_classes",))
def deepset_flattened_forward(params, X, y, *, out_classes):
    """Fused eval-mode forward of DeepSetFlattenedModel in a single pallas_call."""
    B = X.shape[0]
    x2d = X.reshape(B, -1).astype(jnp.float32)   # == unsqueeze(-1).flatten(1,2), as (B, M)
    y2d = y.reshape(B, -1).astype(jnp.float32)   # == y.view(-1, meta_size)

    ordered = (
        x2d, y2d,
        params["eq_alpha"], params["eq_beta"], params["eq_bias"],
        params["inv_beta"], params["inv_bias"],
        params["w1z"], params["w1y"], params["b1"],
        params["bn1_g"], params["bn1_b"], params["bn1_rm"], params["bn1_rv"],
        params["w2"], params["b2"],
        params["bn2_g"], params["bn2_b"], params["bn2_rm"], params["bn2_rv"],
        params["w3"], params["b3"],
    )

    h0 = params["eq_alpha"].shape[1]
    h1 = params["inv_beta"].shape[1]
    p2 = params["w1z"].shape[1]
    p1 = params["w2"].shape[1]
    meta = params["w1y"].shape[0]
    out_pad = params["w3"].shape[1]

    flops = 2 * B * (h0 * h1 + (h1 + meta) * p2 + p2 * p1 + p1 * out_pad) + B * x2d.shape[1]
    bytes_accessed = 4 * (sum(int(a.size) for a in ordered) + B * out_pad)
    cost = pl.CostEstimate(flops=int(flops), transcendentals=int(p2 + p1),
                           bytes_accessed=int(bytes_accessed))

    out_padded = pl.pallas_call(
        functools.partial(_deepset_fused_kernel, eps=1e-5),
        out_shape=jax.ShapeDtypeStruct((B, out_pad), jnp.float32),
        cost_estimate=cost,
    )(*ordered)
    return out_padded[:, :out_classes]


def init_params(key, *, h0, h1, predlast, meta, out_classes, out_pad=128):
    """Deterministic synthetic parameters (PyTorch-style init bounds)."""
    assert out_classes <= out_pad
    p2 = 2 * predlast
    ks = iter(jax.random.split(key, 32))

    def uni(k, shape, bound):
        return jax.random.uniform(k, shape, jnp.float32, -bound, bound)

    def xavier(k, shape):
        bound = (6.0 / (shape[0] + shape[1])) ** 0.5
        return jax.random.uniform(k, shape, jnp.float32, -bound, bound)

    params = {}
    # EquivLinear(1, h0): alpha + (inherited InvLinear) beta & bias
    params["eq_alpha"] = xavier(next(ks), (1, h0))
    params["eq_beta"] = xavier(next(ks), (1, h0))
    params["eq_bias"] = uni(next(ks), (1, h0), 1.0)
    # InvLinear(h0, h1)
    params["inv_beta"] = xavier(next(ks), (h0, h1))
    params["inv_bias"] = uni(next(ks), (1, h1), 1.0 / h0 ** 0.5)
    # classifier Linear 1 (weight split into z-rows / meta-rows to fold the hstack)
    b = 1.0 / (h1 + meta) ** 0.5
    params["w1z"] = uni(next(ks), (h1, p2), b)
    params["w1y"] = uni(next(ks), (meta, p2), b)
    params["b1"] = uni(next(ks), (1, p2), b)
    # BatchNorm1d(2*predlast) eval-mode parameters / running stats
    params["bn1_g"] = jax.random.uniform(next(ks), (1, p2), jnp.float32, 0.5, 1.5)
    params["bn1_b"] = uni(next(ks), (1, p2), 0.1)
    params["bn1_rm"] = uni(next(ks), (1, p2), 0.5)
    params["bn1_rv"] = jax.random.uniform(next(ks), (1, p2), jnp.float32, 0.5, 1.5)
    # classifier Linear 2 + BatchNorm1d(predlast)
    b = 1.0 / p2 ** 0.5
    params["w2"] = uni(next(ks), (p2, predlast), b)
    params["b2"] = uni(next(ks), (1, predlast), b)
    params["bn2_g"] = jax.random.uniform(next(ks), (1, predlast), jnp.float32, 0.5, 1.5)
    params["bn2_b"] = uni(next(ks), (1, predlast), 0.1)
    params["bn2_rm"] = uni(next(ks), (1, predlast), 0.5)
    params["bn2_rv"] = jax.random.uniform(next(ks), (1, predlast), jnp.float32, 0.5, 1.5)
    # classifier Linear 3, zero-padded from out_classes to out_pad output lanes
    b = 1.0 / predlast ** 0.5
    w3 = uni(next(ks), (predlast, out_classes), b)
    b3 = uni(next(ks), (1, out_classes), b)
    params["w3"] = jnp.pad(w3, ((0, 0), (0, out_pad - out_classes)))
    params["b3"] = jnp.pad(b3, ((0, 0), (0, out_pad - out_classes)))
    return params


def reference_forward(params, X, y, out_classes):
    """Pure-JAX literal translation of the PyTorch forward (eval mode)."""
    hp = jax.lax.Precision.HIGHEST
    B = X.shape[0]
    Xs = X.reshape(B, -1)[..., None]                         # (B, M, 1)
    # EquivLinear(1, h0), reduction='mean', no mask
    inv0 = jnp.dot(jnp.mean(Xs, axis=1), params["eq_beta"], precision=hp) + params["eq_bias"]
    H = jnp.einsum("bmi,io->bmo", Xs, params["eq_alpha"], precision=hp) + inv0[:, None, :]
    # InvLinear(h0, h1), reduction='mean'
    Z = jnp.dot(jnp.mean(H, axis=1), params["inv_beta"], precision=hp) + params["inv_bias"]
    feat = jnp.concatenate([Z, y.reshape(B, -1)], axis=1)    # torch.hstack
    W1 = jnp.concatenate([params["w1z"], params["w1y"]], axis=0)

    def bn(u, g, be, rm, rv):
        return (u - rm) / jnp.sqrt(rv + 1e-5) * g + be

    u1 = jnp.dot(feat, W1, precision=hp) + params["b1"]
    a1 = jnp.maximum(bn(u1, params["bn1_g"], params["bn1_b"],
                        params["bn1_rm"], params["bn1_rv"]), 0.0)
    u2 = jnp.dot(a1, params["w2"], precision=hp) + params["b2"]
    a2 = jnp.maximum(bn(u2, params["bn2_g"], params["bn2_b"],
                        params["bn2_rm"], params["bn2_rv"]), 0.0)
    out = jnp.dot(a2, params["w3"], precision=hp) + params["b3"]
    return out[:, :out_classes]


if __name__ == "__main__":
    # Small shapes consistent with the module (CONFIG uses instances=64, features=16,
    # h0=64, h1=128, predlast=256, meta=27, out_classes=3; scaled down here).
    batch = 8
    instances = 16
    features = 8                 # set size M = instances * features = 128
    hidden_size_0 = 64
    hidden_size_1 = 128
    predlast_hidden_size = 128
    meta_size = 27
    out_classes = 3

    key = jax.random.PRNGKey(0)
    k_x, k_y, k_p = jax.random.split(key, 3)
    X = jax.random.normal(k_x, (batch, instances, features), jnp.float32)
    y = jax.random.normal(k_y, (batch, meta_size), jnp.float32)
    params = init_params(k_p, h0=hidden_size_0, h1=hidden_size_1,
                         predlast=predlast_hidden_size, meta=meta_size,
                         out_classes=out_classes)

    out = jax.block_until_ready(
        deepset_flattened_forward(params, X, y, out_classes=out_classes))
    ref = jax.block_until_ready(reference_forward(params, X, y, out_classes))

    assert out.shape == (batch, out_classes), out.shape
    max_err = float(jnp.max(jnp.abs(out - ref)))
    assert bool(jnp.allclose(out, ref, rtol=2e-2, atol=2e-2)), f"max abs err = {max_err}"
    print("KERNEL_OK")
</pallas_src>

<mosaic_0001>
module attributes {stable_mosaic.version = 11 : i64} {
  func.func @_deepset_fused_kernel(%arg0: memref<8x128xf32, #tpu.memory_space<vmem>>, %arg1: memref<8x27xf32, #tpu.memory_space<vmem>>, %arg2: memref<1x64xf32, #tpu.memory_space<vmem>>, %arg3: memref<1x64xf32, #tpu.memory_space<vmem>>, %arg4: memref<1x64xf32, #tpu.memory_space<vmem>>, %arg5: memref<64x128xf32, #tpu.memory_space<vmem>>, %arg6: memref<1x128xf32, #tpu.memory_space<vmem>>, %arg7: memref<128x256xf32, #tpu.memory_space<vmem>>, %arg8: memref<27x256xf32, #tpu.memory_space<vmem>>, %arg9: memref<1x256xf32, #tpu.memory_space<vmem>>, %arg10: memref<1x256xf32, #tpu.memory_space<vmem>>, %arg11: memref<1x256xf32, #tpu.memory_space<vmem>>, %arg12: memref<1x256xf32, #tpu.memory_space<vmem>>, %arg13: memref<1x256xf32, #tpu.memory_space<vmem>>, %arg14: memref<256x128xf32, #tpu.memory_space<vmem>>, %arg15: memref<1x128xf32, #tpu.memory_space<vmem>>, %arg16: memref<1x128xf32, #tpu.memory_space<vmem>>, %arg17: memref<1x128xf32, #tpu.memory_space<vmem>>, %arg18: memref<1x128xf32, #tpu.memory_space<vmem>>, %arg19: memref<1x128xf32, #tpu.memory_space<vmem>>, %arg20: memref<128x128xf32, #tpu.memory_space<vmem>>, %arg21: memref<1x128xf32, #tpu.memory_space<vmem>>, %arg22: memref<8x128xf32, #tpu.memory_space<vmem>>) attributes {dimension_semantics = [], scalar_prefetch = 0 : i64, scratch_operands = 0 : i64, tpu.core_type = #tpu.core_type<tc>} {
    %c0 = arith.constant 0 : index
    %c0_0 = arith.constant 0 : index
    %0 = vector.load %arg0[%c0, %c0_0] : memref<8x128xf32, #tpu.memory_space<vmem>>, vector<8x128xf32>
    %cst = arith.constant dense<0.000000e+00> : vector<8xf32>
    %1 = vector.multi_reduction <add>, %0, %cst [1] : vector<8x128xf32> to vector<8xf32>
    %2 = vector.shape_cast %1 : vector<8xf32> to vector<8x1xf32>
    %cst_1 = arith.constant 7.812500e-03 : f32
    %3 = vector.broadcast %cst_1 : f32 to vector<8x1xf32>
    %4 = arith.mulf %2, %3 : vector<8x1xf32>
    %c0_2 = arith.constant 0 : index
    %c0_3 = arith.constant 0 : index
    %5 = vector.load %arg2[%c0_2, %c0_3] : memref<1x64xf32, #tpu.memory_space<vmem>>, vector<1x64xf32>
    %c0_4 = arith.constant 0 : index
    %c0_5 = arith.constant 0 : index
    %6 = vector.load %arg3[%c0_4, %c0_5] : memref<1x64xf32, #tpu.memory_space<vmem>>, vector<1x64xf32>
    %7 = arith.addf %5, %6 : vector<1x64xf32>
    %8 = vector.broadcast %4 : vector<8x1xf32> to vector<8x64xf32>
    %9 = vector.broadcast %7 : vector<1x64xf32> to vector<8x64xf32>
    %10 = arith.mulf %8, %9 : vector<8x64xf32>
    %c0_6 = arith.constant 0 : index
    %c0_7 = arith.constant 0 : index
    %11 = vector.load %arg4[%c0_6, %c0_7] : memref<1x64xf32, #tpu.memory_space<vmem>>, vector<1x64xf32>
    %12 = vector.broadcast %11 : vector<1x64xf32> to vector<8x64xf32>
    %13 = arith.addf %10, %12 : vector<8x64xf32>
    %c0_8 = arith.constant 0 : index
    %c0_9 = arith.constant 0 : index
    %14 = vector.load %arg5[%c0_8, %c0_9] : memref<64x128xf32, #tpu.memory_space<vmem>>, vector<64x128xf32>
    %cst_10 = arith.constant dense<0.000000e+00> : vector<8x128xf32>
    %15 = tpu.matmul %13, %14, %cst_10 {dimension_numbers = #tpu.dot_dimension_numbers<[1], [0], [0], [1], [0, 0, 1, 1], [], []>} : vector<8x64xf32>, vector<64x128xf32>, vector<8x128xf32> -> vector<8x128xf32>
    %c0_11 = arith.constant 0 : index
    %c0_12 = arith.constant 0 : index
    %16 = vector.load %arg6[%c0_11, %c0_12] : memref<1x128xf32, #tpu.memory_space<vmem>>, vector<1x128xf32>
    %17 = vector.broadcast %16 : vector<1x128xf32> to vector<8x128xf32>
    %18 = arith.addf %15, %17 : vector<8x128xf32>
    %c0_13 = arith.constant 0 : index
    %c0_14 = arith.constant 0 : index
    %19 = vector.load %arg7[%c0_13, %c0_14] : memref<128x256xf32, #tpu.memory_space<vmem>>, vector<128x256xf32>
    %cst_15 = arith.constant dense<0.000000e+00> : vector<8x256xf32>
    %20 = tpu.matmul %18, %19, %cst_15 {dimension_numbers = #tpu.dot_dimension_numbers<[1], [0], [0], [1], [0, 0, 1, 1], [], []>} : vector<8x128xf32>, vector<128x256xf32>, vector<8x256xf32> -> vector<8x256xf32>
    %c0_16 = arith.constant 0 : index
    %c0_17 = arith.constant 0 : index
    %21 = vector.load %arg1[%c0_16, %c0_17] : memref<8x27xf32, #tpu.memory_space<vmem>>, vector<8x27xf32>
    %c0_18 = arith.constant 0 : index
    %c0_19 = arith.constant 0 : index
    %22 = vector.load %arg8[%c0_18, %c0_19] : memref<27x256xf32, #tpu.memory_space<vmem>>, vector<27x256xf32>
    %cst_20 = arith.constant dense<0.000000e+00> : vector<8x256xf32>
    %23 = tpu.matmul %21, %22, %cst_20 {dimension_numbers = #tpu.dot_dimension_numbers<[1], [0], [0], [1], [0, 0, 1, 1], [], []>} : vector<8x27xf32>, vector<27x256xf32>, vector<8x256xf32> -> vector<8x256xf32>
    %24 = arith.addf %20, %23 : vector<8x256xf32>
    %c0_21 = arith.constant 0 : index
    %c0_22 = arith.constant 0 : index
    %25 = vector.load %arg9[%c0_21, %c0_22] : memref<1x256xf32, #tpu.memory_space<vmem>>, vector<1x256xf32>
    %26 = vector.broadcast %25 : vector<1x256xf32> to vector<8x256xf32>
    %27 = arith.addf %24, %26 : vector<8x256xf32>
    %c0_23 = arith.constant 0 : index
    %c0_24 = arith.constant 0 : index
    %28 = vector.load %arg10[%c0_23, %c0_24] : memref<1x256xf32, #tpu.memory_space<vmem>>, vector<1x256xf32>
    %c0_25 = arith.constant 0 : index
    %c0_26 = arith.constant 0 : index
    %29 = vector.load %arg13[%c0_25, %c0_26] : memref<1x256xf32, #tpu.memory_space<vmem>>, vector<1x256xf32>
    %cst_27 = arith.constant 9.99999974E-6 : f32
    %30 = vector.broadcast %cst_27 : f32 to vector<1x256xf32>
    %31 = arith.addf %29, %30 : vector<1x256xf32>
    %32 = math.rsqrt %31 : vector<1x256xf32>
    %33 = arith.mulf %28, %32 : vector<1x256xf32>
    %c0_28 = arith.constant 0 : index
    %c0_29 = arith.constant 0 : index
    %34 = vector.load %arg12[%c0_28, %c0_29] : memref<1x256xf32, #tpu.memory_space<vmem>>, vector<1x256xf32>
    %35 = vector.broadcast %34 : vector<1x256xf32> to vector<8x256xf32>
    %36 = arith.subf %27, %35 : vector<8x256xf32>
    %37 = vector.broadcast %33 : vector<1x256xf32> to vector<8x256xf32>
    %38 = arith.mulf %36, %37 : vector<8x256xf32>
    %c0_30 = arith.constant 0 : index
    %c0_31 = arith.constant 0 : index
    %39 = vector.load %arg11[%c0_30, %c0_31] : memref<1x256xf32, #tpu.memory_space<vmem>>, vector<1x256xf32>
    %40 = vector.broadcast %39 : vector<1x256xf32> to vector<8x256xf32>
    %41 = arith.addf %38, %40 : vector<8x256xf32>
    %cst_32 = arith.constant 0.000000e+00 : f32
    %42 = vector.broadcast %cst_32 : f32 to vector<8x256xf32>
    %43 = arith.maximumf %41, %42 : vector<8x256xf32>
    %c0_33 = arith.constant 0 : index
    %c0_34 = arith.constant 0 : index
    %44 = vector.load %arg14[%c0_33, %c0_34] : memref<256x128xf32, #tpu.memory_space<vmem>>, vector<256x128xf32>
    %cst_35 = arith.constant dense<0.000000e+00> : vector<8x128xf32>
    %45 = tpu.matmul %43, %44, %cst_35 {dimension_numbers = #tpu.dot_dimension_numbers<[1], [0], [0], [1], [0, 0, 1, 1], [], []>} : vector<8x256xf32>, vector<256x128xf32>, vector<8x128xf32> -> vector<8x128xf32>
    %c0_36 = arith.constant 0 : index
    %c0_37 = arith.constant 0 : index
    %46 = vector.load %arg15[%c0_36, %c0_37] : memref<1x128xf32, #tpu.memory_space<vmem>>, vector<1x128xf32>
    %47 = vector.broadcast %46 : vector<1x128xf32> to vector<8x128xf32>
    %48 = arith.addf %45, %47 : vector<8x128xf32>
    %c0_38 = arith.constant 0 : index
    %c0_39 = arith.constant 0 : index
    %49 = vector.load %arg16[%c0_38, %c0_39] : memref<1x128xf32, #tpu.memory_space<vmem>>, vector<1x128xf32>
    %c0_40 = arith.constant 0 : index
    %c0_41 = arith.constant 0 : index
    %50 = vector.load %arg19[%c0_40, %c0_41] : memref<1x128xf32, #tpu.memory_space<vmem>>, vector<1x128xf32>
    %cst_42 = arith.constant 9.99999974E-6 : f32
    %51 = vector.broadcast %cst_42 : f32 to vector<1x128xf32>
    %52 = arith.addf %50, %51 : vector<1x128xf32>
    %53 = math.rsqrt %52 : vector<1x128xf32>
    %54 = arith.mulf %49, %53 : vector<1x128xf32>
    %c0_43 = arith.constant 0 : index
    %c0_44 = arith.constant 0 : index
    %55 = vector.load %arg18[%c0_43, %c0_44] : memref<1x128xf32, #tpu.memory_space<vmem>>, vector<1x128xf32>
    %56 = vector.broadcast %55 : vector<1x128xf32> to vector<8x128xf32>
    %57 = arith.subf %48, %56 : vector<8x128xf32>
    %58 = vector.broadcast %54 : vector<1x128xf32> to vector<8x128xf32>
    %59 = arith.mulf %57, %58 : vector<8x128xf32>
    %c0_45 = arith.constant 0 : index
    %c0_46 = arith.constant 0 : index
    %60 = vector.load %arg17[%c0_45, %c0_46] : memref<1x128xf32, #tpu.memory_space<vmem>>, vector<1x128xf32>
    %61 = vector.broadcast %60 : vector<1x128xf32> to vector<8x128xf32>
    %62 = arith.addf %59, %61 : vector<8x128xf32>
    %cst_47 = arith.constant 0.000000e+00 : f32
    %63 = vector.broadcast %cst_47 : f32 to vector<8x128xf32>
    %64 = arith.maximumf %62, %63 : vector<8x128xf32>
    %c0_48 = arith.constant 0 : index
    %c0_49 = arith.constant 0 : index
    %65 = vector.load %arg20[%c0_48, %c0_49] : memref<128x128xf32, #tpu.memory_space<vmem>>, vector<128x128xf32>
    %cst_50 = arith.constant dense<0.000000e+00> : vector<8x128xf32>
    %66 = tpu.matmul %64, %65, %cst_50 {dimension_numbers = #tpu.dot_dimension_numbers<[1], [0], [0], [1], [0, 0, 1, 1], [], []>} : vector<8x128xf32>, vector<128x128xf32>, vector<8x128xf32> -> vector<8x128xf32>
    %c0_51 = arith.constant 0 : index
    %c0_52 = arith.constant 0 : index
    %67 = vector.load %arg21[%c0_51, %c0_52] : memref<1x128xf32, #tpu.memory_space<vmem>>, vector<1x128xf32>
    %68 = vector.broadcast %67 : vector<1x128xf32> to vector<8x128xf32>
    %69 = arith.addf %66, %68 : vector<8x128xf32>
    %c0_53 = arith.constant 0 : index
    %c0_54 = arith.constant 0 : index
    %70 = vector.load %arg22[%c0_53, %c0_54] : memref<8x128xf32, #tpu.memory_space<vmem>>, vector<8x128xf32>
    tpu.vector_store %arg22[%c0_53, %c0_54], %69 {strides = array<i32>} : memref<8x128xf32, #tpu.memory_space<vmem>>, vector<8x128xf32>,
    return
  }
}

</mosaic_0001>

<llo_original>
// kernel: deepset_flattened_forward.1
$region0: #{deepset_flattened_forward.1}
  #allocation0 [shape = 'u32[]', space=smem, size = 0x4, offset = 0x4, fixed_abs, tag = 'smem constant byte address 0x4 - core index']
  #allocation1 [shape = 'u32[144,128]{1,0:T(1,128)}', space=vmem, size = 0x12000, scoped, tag = 'internal scratch']
  %s0 = inlined_call_operand.vmem [shape: f32[8,128], index: 0, kind: input, shape index: {}]
  %s1 = inlined_call_operand.vmem [shape: f32[8,27], index: 1, kind: input, shape index: {}]
  %s2 = inlined_call_operand.hbm [shape: f32[1,64], index: 2, kind: input, shape index: {}]
  %s3 = inlined_call_operand.hbm [shape: f32[1,64], index: 3, kind: input, shape index: {}]
  %s4 = inlined_call_operand.hbm [shape: f32[1,64], index: 4, kind: input, shape index: {}]
  %s5 = inlined_call_operand.hbm [shape: f32[64,128], index: 5, kind: input, shape index: {}]
  %s6 = inlined_call_operand.hbm [shape: f32[1,128], index: 6, kind: input, shape index: {}]
  %s7 = inlined_call_operand.vmem [shape: f32[128,256], index: 7, kind: input, shape index: {}]
  %s8 = inlined_call_operand.hbm [shape: f32[27,256], index: 8, kind: input, shape index: {}]
  %s9 = inlined_call_operand.hbm [shape: f32[1,256], index: 9, kind: input, shape index: {}]
  %s10 = inlined_call_operand.hbm [shape: f32[1,256], index: 10, kind: input, shape index: {}]
  %s11 = inlined_call_operand.hbm [shape: f32[1,256], index: 11, kind: input, shape index: {}]
  %s12 = inlined_call_operand.hbm [shape: f32[1,256], index: 12, kind: input, shape index: {}]
  %s13 = inlined_call_operand.hbm [shape: f32[1,256], index: 13, kind: input, shape index: {}]
  %s14 = inlined_call_operand.hbm [shape: f32[256,128], index: 14, kind: input, shape index: {}]
  %s15 = inlined_call_operand.hbm [shape: f32[1,128], index: 15, kind: input, shape index: {}]
  %s16 = inlined_call_operand.hbm [shape: f32[1,128], index: 16, kind: input, shape index: {}]
  %s17 = inlined_call_operand.hbm [shape: f32[1,128], index: 17, kind: input, shape index: {}]
  %s18 = inlined_call_operand.hbm [shape: f32[1,128], index: 18, kind: input, shape index: {}]
  %s19 = inlined_call_operand.hbm [shape: f32[1,128], index: 19, kind: input, shape index: {}]
  %s20 = inlined_call_operand.vmem [shape: f32[128,128], index: 20, kind: input, shape index: {}]
  %s21 = inlined_call_operand.hbm [shape: f32[1,128], index: 21, kind: input, shape index: {}]
  %s22 = inlined_call_operand.vmem [shape: f32[8,128], index: 22, kind: output, shape index: {}]
  %s23 = sld [smem:[#allocation0]]
  $region170: #{deepset_flattened_forward.1} parent=0
    _
  %s25 = ssub.s32 1, %s23
  %s26 = scalar_select 0, %s25, %s23
  $region1: #{deepset_flattened_forward.1} parent=0
    #allocation2 [shape = 'u8[512]{0}', space=vmem, size = 0x400, scoped, tag = 'input window, operand 2, single buffered']
    #allocation3 [shape = 's32[1]{0}', space=sflag, size = 0x4, scoped, tag = 'scoped memory for deepset_flattened_forward.1']
    #allocation4 [shape = 'u8[512]{0}', space=vmem, size = 0x400, scoped, tag = 'input window, operand 3, single buffered']
    #allocation5 [shape = 's32[1]{0}', space=sflag, size = 0x4, scoped, tag = 'scoped memory for deepset_flattened_forward.1']
    #allocation6 [shape = 'u8[512]{0}', space=vmem, size = 0x400, scoped, tag = 'input window, operand 4, single buffered']
    #allocation7 [shape = 'u8[32768]{0}', space=vmem, size = 0x8000, scoped, tag = 'input window, operand 5, single buffered']
    #allocation8 [shape = 's32[1]{0}', space=sflag, size = 0x4, scoped, tag = 'scoped memory for deepset_flattened_forward.1']
    #allocation9 [shape = 'u8[512]{0}', space=vmem, size = 0x400, scoped, tag = 'input window, operand 6, single buffered']
    #allocation10 [shape = 'u8[32768]{0}', space=vmem, size = 0x8000, scoped, tag = 'input window, operand 8, single buffered']
    #allocation11 [shape = 's32[1]{0}', space=sflag, size = 0x4, scoped, tag = 'scoped memory for deepset_flattened_forward.1']
    #allocation12 [shape = 'u8[1024]{0}', space=vmem, size = 0x400, scoped, tag = 'input window, operand 9, single buffered']
    #allocation13 [shape = 'u8[1024]{0}', space=vmem, size = 0x400, scoped, tag = 'input window, operand 10, single buffered']
    #allocation14 [shape = 's32[1]{0}', space=sflag, size = 0x4, scoped, tag = 'scoped memory for deepset_flattened_forward.1']
    #allocation15 [shape = 'u8[1024]{0}', space=vmem, size = 0x400, scoped, tag = 'input window, operand 11, single buffered']
    #allocation16 [shape = 'u8[1024]{0}', space=vmem, size = 0x400, scoped, tag = 'input window, operand 12, single buffered']
    #allocation17 [shape = 's32[1]{0}', space=sflag, size = 0x4, scoped, tag = 'scoped memory for deepset_flattened_forward.1']
    #allocation18 [shape = 'u8[1024]{0}', space=vmem, size = 0x400, scoped, tag = 'input window, operand 13, single buffered']
    #allocation19 [shape = 'u8[131072]{0}', space=vmem, size = 0x20000, scoped, tag = 'input window, operand 14, single buffered']
    #allocation20 [shape = 's32[1]{0}', space=sflag, size = 0x4, scoped, tag = 'scoped memory for deepset_flattened_forward.1']
    #allocation21 [shape = 'u8[512]{0}', space=vmem, size = 0x400, scoped, tag = 'input window, operand 15, single buffered']
    #allocation22 [shape = 'u8[512]{0}', space=vmem, size = 0x400, scoped, tag = 'input window, operand 16, single buffered']
    #allocation23 [shape = 's32[1]{0}', space=sflag, size = 0x4, scoped, tag = 'scoped memory for deepset_flattened_forward.1']
    #allocation24 [shape = 'u8[512]{0}', space=vmem, size = 0x400, scoped, tag = 'input window, operand 17, single buffered']
    #allocation25 [shape = 'u8[512]{0}', space=vmem, size = 0x400, scoped, tag = 'input window, operand 18, single buffered']
    #allocation26 [shape = 's32[1]{0}', space=sflag, size = 0x4, scoped, tag = 'scoped memory for deepset_flattened_forward.1']
    #allocation27 [shape = 'u8[512]{0}', space=vmem, size = 0x400, scoped, tag = 'input window, operand 19, single buffered']
    #allocation28 [shape = 'u8[512]{0}', space=vmem, size = 0x400, scoped, tag = 'input window, operand 21, single buffered']
    #allocation29 [shape = 's32[1]{0}', space=sflag, size = 0x4, scoped, tag = 'scoped memory for deepset_flattened_forward.1']
    %27 = vsyncpa [#allocation3], 0
    %28 = vsyncpa [#allocation5], 0
    %29 = vsyncpa [#allocation8], 0
    %30 = vsyncpa [#allocation11], 0
    %31 = vsyncpa [#allocation14], 0
    %32 = vsyncpa [#allocation17], 0
    %33 = vsyncpa [#allocation20], 0
    %34 = vsyncpa [#allocation23], 0
    %35 = vsyncpa [#allocation26], 0
    %36 = vsyncpa [#allocation29], 0
    // Predicated region
    $region2: #{deepset_flattened_forward.1} parent=1 // pred_check
      _
    $region3: #{deepset_flattened_forward.1} parent=1 // pred_check_branch
      %38 = sbr.rel (0) target = $region5
    $region4: #{deepset_flattened_forward.1} parent=1 // pred_region
      _
    $region5: #{deepset_flattened_forward.1} parent=1 // pred_fallthru
      _
    // Predicated region
    $region6: #{deepset_flattened_forward.1} parent=1 // pred_check
      _
    $region7: #{deepset_flattened_forward.1} parent=1 // pred_check_branch
      %40 = sbr.rel (0) target = $region9
    $region8: #{deepset_flattened_forward.1} parent=1 // pred_region
      _
    $region9: #{deepset_flattened_forward.1} parent=1 // pred_fallthru
      _
    // Predicated region
    $region10: #{deepset_flattened_forward.1} parent=1 // pred_check
      _
    $region11: #{deepset_flattened_forward.1} parent=1 // pred_check_branch
      %42 = sbr.rel (0) target = $region13
    $region12: #{deepset_flattened_forward.1} parent=1 // pred_region
      %s44 = ssub.s32 16, 16
      %45 = vsyncadd [#allocation3], %s44
      %s47 = sshll.u32 [#allocation2], 4
      %s48 = int_to_ptr.vmem [resolvable:$true] %s47
      %50 = dma.hbm_to_vmem [thread:$0]  %s2, 16, %s48, [#allocation3]
    $region13: #{deepset_flattened_forward.1} parent=1 // pred_fallthru
      _
    // Predicated region
    $region14: #{deepset_flattened_forward.1} parent=1 // pred_check
      _
    $region15: #{deepset_flattened_forward.1} parent=1 // pred_check_branch
      %52 = sbr.rel (0) target = $region17
    $region16: #{deepset_flattened_forward.1} parent=1 // pred_region
      %s54 = ssub.s32 16, 16
      %55 = vsyncadd [#allocation5], %s54
      %s57 = sshll.u32 [#allocation4], 4
      %s58 = int_to_ptr.vmem [resolvable:$true] %s57
      %60 = dma.hbm_to_vmem [thread:$0]  %s3, 16, %s58, [#allocation5]
    $region17: #{deepset_flattened_forward.1} parent=1 // pred_fallthru
      _
    // Predicated region
    $region18: #{deepset_flattened_forward.1} parent=1 // pred_check
      _
    $region19: #{deepset_flattened_forward.1} parent=1 // pred_check_branch
      %62 = sbr.rel (0) target = $region21
    $region20: #{deepset_flattened_forward.1} parent=1 // pred_region
      %s64 = ssub.s32 16, 16
      %65 = vsyncadd [#allocation5], %s64
      %s67 = sshll.u32 [#allocation6], 4
      %s68 = int_to_ptr.vmem [resolvable:$true] %s67
      %70 = dma.hbm_to_vmem [thread:$0]  %s4, 16, %s68, [#allocation5]
    $region21: #{deepset_flattened_forward.1} parent=1 // pred_fallthru
      _
    // Predicated region
    $region22: #{deepset_flattened_forward.1} parent=1 // pred_check
      _
    $region23: #{deepset_flattened_forward.1} parent=1 // pred_check_branch
      %72 = sbr.rel (0) target = $region25
    $region24: #{deepset_flattened_forward.1} parent=1 // pred_region
      %s74 = ssub.s32 1024, 1024
      %75 = vsyncadd [#allocation8], %s74
      %s76 = sshll.u32 [#allocation7], 4
      %s77 = int_to_ptr.vmem [resolvable:$true] %s76
      %82 = dma.hbm_to_vmem [thread:$0]  %s5, 1024, %s77, [#allocation8], 128, 128, 8
    $region25: #{deepset_flattened_forward.1} parent=1 // pred_fallthru
      _
    // Predicated region
    $region26: #{deepset_flattened_forward.1} parent=1 // pred_check
      _
    $region27: #{deepset_flattened_forward.1} parent=1 // pred_check_branch
      %84 = sbr.rel (0) target = $region29
    $region28: #{deepset_flattened_forward.1} parent=1 // pred_region
      %s86 = ssub.s32 16, 16
      %87 = vsyncadd [#allocation8], %s86
      %s89 = sshll.u32 [#allocation9], 4
      %s90 = int_to_ptr.vmem [resolvable:$true] %s89
      %92 = dma.hbm_to_vmem [thread:$0]  %s6, 16, %s90, [#allocation8]
    $region29: #{deepset_flattened_forward.1} parent=1 // pred_fallthru
      _
    // Predicated region
    $region30: #{deepset_flattened_forward.1} parent=1 // pred_check
      _
    $region31: #{deepset_flattened_forward.1} parent=1 // pred_check_branch
      %94 = sbr.rel (0) target = $region33
    $region32: #{deepset_flattened_forward.1} parent=1 // pred_region
      _
    $region33: #{deepset_flattened_forward.1} parent=1 // pred_fallthru
      _
    // Predicated region
    $region34: #{deepset_flattened_forward.1} parent=1 // pred_check
      _
    $region35: #{deepset_flattened_forward.1} parent=1 // pred_check_branch
      %96 = sbr.rel (0) target = $region37
    $region36: #{deepset_flattened_forward.1} parent=1 // pred_region
      %s98 = ssub.s32 1024, 1024
      %99 = vsyncadd [#allocation11], %s98
      %s100 = sshll.u32 [#allocation10], 4
      %s101 = int_to_ptr.vmem [resolvable:$true] %s100
      %106 = dma.hbm_to_vmem [thread:$0]  %s8, 1024, %s101, [#allocation11], 256, 256, 16
    $region37: #{deepset_flattened_forward.1} parent=1 // pred_fallthru
      _
    // Predicated region
    $region38: #{deepset_flattened_forward.1} parent=1 // pred_check
      _
    $region39: #{deepset_flattened_forward.1} parent=1 // pred_check_branch
      %108 = sbr.rel (0) target = $region41
    $region40: #{deepset_flattened_forward.1} parent=1 // pred_region
      %s110 = ssub.s32 32, 32
      %111 = vsyncadd [#allocation11], %s110
      %s113 = sshll.u32 [#allocation12], 4
      %s114 = int_to_ptr.vmem [resolvable:$true] %s113
      %116 = dma.hbm_to_vmem [thread:$0]  %s9, 32, %s114, [#allocation11]
    $region41: #{deepset_flattened_forward.1} parent=1 // pred_fallthru
      _
    // Predicated region
    $region42: #{deepset_flattened_forward.1} parent=1 // pred_check
      _
    $region43: #{deepset_flattened_forward.1} parent=1 // pred_check_branch
      %118 = sbr.rel (0) target = $region45
    $region44: #{deepset_flattened_forward.1} parent=1 // pred_region
      %s120 = ssub.s32 32, 32
      %121 = vsyncadd [#allocation14], %s120
      %s123 = sshll.u32 [#allocation13], 4
      %s124 = int_to_ptr.vmem [resolvable:$true] %s123
      %126 = dma.hbm_to_vmem [thread:$0]  %s10, 32, %s124, [#allocation14]
    $region45: #{deepset_flattened_forward.1} parent=1 // pred_fallthru
      _
    // Predicated region
    $region46: #{deepset_flattened_forward.1} parent=1 // pred_check
      _
    $region47: #{deepset_flattened_forward.1} parent=1 // pred_check_branch
      %128 = sbr.rel (0) target = $region49
    $region48: #{deepset_flattened_forward.1} parent=1 // pred_region
      %s130 = ssub.s32 32, 32
      %131 = vsyncadd [#allocation14], %s130
      %s133 = sshll.u32 [#allocation15], 4
      %s134 = int_to_ptr.vmem [resolvable:$true] %s133
      %136 = dma.hbm_to_vmem [thread:$0]  %s11, 32, %s134, [#allocation14]
    $region49: #{deepset_flattened_forward.1} parent=1 // pred_fallthru
      _
    // Predicated region
    $region50: #{deepset_flattened_forward.1} parent=1 // pred_check
      _
    $region51: #{deepset_flattened_forward.1} parent=1 // pred_check_branch
      %138 = sbr.rel (0) target = $region53
    $region52: #{deepset_flattened_forward.1} parent=1 // pred_region
      %s140 = ssub.s32 32, 32
      %141 = vsyncadd [#allocation17], %s140
      %s143 = sshll.u32 [#allocation16], 4
      %s144 = int_to_ptr.vmem [resolvable:$true] %s143
      %146 = dma.hbm_to_vmem [thread:$0]  %s12, 32, %s144, [#allocation17]
    $region53: #{deepset_flattened_forward.1} parent=1 // pred_fallthru
      _
    // Predicated region
    $region54: #{deepset_flattened_forward.1} parent=1 // pred_check
      _
    $region55: #{deepset_flattened_forward.1} parent=1 // pred_check_branch
      %148 = sbr.rel (0) target = $region57
    $region56: #{deepset_flattened_forward.1} parent=1 // pred_region
      %s150 = ssub.s32 32, 32
      %151 = vsyncadd [#allocation17], %s150
      %s153 = sshll.u32 [#allocation18], 4
      %s154 = int_to_ptr.vmem [resolvable:$true] %s153
      %156 = dma.hbm_to_vmem [thread:$0]  %s13, 32, %s154, [#allocation17]
    $region57: #{deepset_flattened_forward.1} parent=1 // pred_fallthru
      _
    // Predicated region
    $region58: #{deepset_flattened_forward.1} parent=1 // pred_check
      _
    $region59: #{deepset_flattened_forward.1} parent=1 // pred_check_branch
      %158 = sbr.rel (0) target = $region61
    $region60: #{deepset_flattened_forward.1} parent=1 // pred_region
      %s160 = ssub.s32 4096, 4096
      %161 = vsyncadd [#allocation20], %s160
      %s162 = sshll.u32 [#allocation19], 4
      %s163 = int_to_ptr.vmem [resolvable:$true] %s162
      %168 = dma.hbm_to_vmem [thread:$0]  %s14, 4096, %s163, [#allocation20], 128, 128, 8
    $region61: #{deepset_flattened_forward.1} parent=1 // pred_fallthru
      _
    // Predicated region
    $region62: #{deepset_flattened_forward.1} parent=1 // pred_check
      _
    $region63: #{deepset_flattened_forward.1} parent=1 // pred_check_branch
      %170 = sbr.rel (0) target = $region65
    $region64: #{deepset_flattened_forward.1} parent=1 // pred_region
      %s172 = ssub.s32 16, 16
      %173 = vsyncadd [#allocation20], %s172
      %s175 = sshll.u32 [#allocation21], 4
      %s176 = int_to_ptr.vmem [resolvable:$true] %s175
      %178 = dma.hbm_to_vmem [thread:$0]  %s15, 16, %s176, [#allocation20]
    $region65: #{deepset_flattened_forward.1} parent=1 // pred_fallthru
      _
    // Predicated region
    $region66: #{deepset_flattened_forward.1} parent=1 // pred_check
      _
    $region67: #{deepset_flattened_forward.1} parent=1 // pred_check_branch
      %180 = sbr.rel (0) target = $region69
    $region68: #{deepset_flattened_forward.1} parent=1 // pred_region
      %s182 = ssub.s32 16, 16
      %183 = vsyncadd [#allocation23], %s182
      %s185 = sshll.u32 [#allocation22], 4
      %s186 = int_to_ptr.vmem [resolvable:$true] %s185
      %188 = dma.hbm_to_vmem [thread:$0]  %s16, 16, %s186, [#allocation23]
    $region69: #{deepset_flattened_forward.1} parent=1 // pred_fallthru
      _
    // Predicated region
    $region70: #{deepset_flattened_forward.1} parent=1 // pred_check
      _
    $region71: #{deepset_flattened_forward.1} parent=1 // pred_check_branch
      %190 = sbr.rel (0) target = $region73
    $region72: #{deepset_flattened_forward.1} parent=1 // pred_region
      %s192 = ssub.s32 16, 16
      %193 = vsyncadd [#allocation23], %s192
      %s195 = sshll.u32 [#allocation24], 4
      %s196 = int_to_ptr.vmem [resolvable:$true] %s195
      %198 = dma.hbm_to_vmem [thread:$0]  %s17, 16, %s196, [#allocation23]
    $region73: #{deepset_flattened_forward.1} parent=1 // pred_fallthru
      _
    // Predicated region
    $region74: #{deepset_flattened_forward.1} parent=1 // pred_check
      _
    $region75: #{deepset_flattened_forward.1} parent=1 // pred_check_branch
      %200 = sbr.rel (0) target = $region77
    $region76: #{deepset_flattened_forward.1} parent=1 // pred_region
      %s202 = ssub.s32 16, 16
      %203 = vsyncadd [#allocation26], %s202
      %s205 = sshll.u32 [#allocation25], 4
      %s206 = int_to_ptr.vmem [resolvable:$true] %s205
      %208 = dma.hbm_to_vmem [thread:$0]  %s18, 16, %s206, [#allocation26]
    $region77: #{deepset_flattened_forward.1} parent=1 // pred_fallthru
      _
    // Predicated region
    $region78: #{deepset_flattened_forward.1} parent=1 // pred_check
      _
    $region79: #{deepset_flattened_forward.1} parent=1 // pred_check_branch
      %210 = sbr.rel (0) target = $region81
    $region80: #{deepset_flattened_forward.1} parent=1 // pred_region
      %s212 = ssub.s32 16, 16
      %213 = vsyncadd [#allocation26], %s212
      %s215 = sshll.u32 [#allocation27], 4
      %s216 = int_to_ptr.vmem [resolvable:$true] %s215
      %218 = dma.hbm_to_vmem [thread:$0]  %s19, 16, %s216, [#allocation26]
    $region81: #{deepset_flattened_forward.1} parent=1 // pred_fallthru
      _
    // Predicated region
    $region82: #{deepset_flattened_forward.1} parent=1 // pred_check
      _
    $region83: #{deepset_flattened_forward.1} parent=1 // pred_check_branch
      %220 = sbr.rel (0) target = $region85
    $region84: #{deepset_flattened_forward.1} parent=1 // pred_region
      _
    $region85: #{deepset_flattened_forward.1} parent=1 // pred_fallthru
      _
    // Predicated region
    $region86: #{deepset_flattened_forward.1} parent=1 // pred_check
      _
    $region87: #{deepset_flattened_forward.1} parent=1 // pred_check_branch
      %222 = sbr.rel (0) target = $region89
    $region88: #{deepset_flattened_forward.1} parent=1 // pred_region
      %s224 = ssub.s32 16, 16
      %225 = vsyncadd [#allocation29], %s224
      %s227 = sshll.u32 [#allocation28], 4
      %s228 = int_to_ptr.vmem [resolvable:$true] %s227
      %230 = dma.hbm_to_vmem [thread:$0]  %s21, 16, %s228, [#allocation29]
    $region89: #{deepset_flattened_forward.1} parent=1 // pred_fallthru
      _
    // Predicated region
    $region90: #{deepset_flattened_forward.1} parent=1 // pred_check
      _
    $region91: #{deepset_flattened_forward.1} parent=1 // pred_check_branch
      %232 = sbr.rel (0) target = $region93
    $region92: #{deepset_flattened_forward.1} parent=1 // pred_region
      %233 = dma.done [#allocation3], 16
    $region93: #{deepset_flattened_forward.1} parent=1 // pred_fallthru
      _
    // Predicated region
    $region94: #{deepset_flattened_forward.1} parent=1 // pred_check
      _
    $region95: #{deepset_flattened_forward.1} parent=1 // pred_check_branch
      %235 = sbr.rel (0) target = $region97
    $region96: #{deepset_flattened_forward.1} parent=1 // pred_region
      %236 = dma.done [#allocation5], 16
    $region97: #{deepset_flattened_forward.1} parent=1 // pred_fallthru
      _
    // Predicated region
    $region98: #{deepset_flattened_forward.1} parent=1 // pred_check
      _
    $region99: #{deepset_flattened_forward.1} parent=1 // pred_check_branch
      %238 = sbr.rel (0) target = $region101
    $region100: #{deepset_flattened_forward.1} parent=1 // pred_region
      %239 = dma.done [#allocation5], 16
    $region101: #{deepset_flattened_forward.1} parent=1 // pred_fallthru
      _
    // Predicated region
    $region102: #{deepset_flattened_forward.1} parent=1 // pred_check
      _
    $region103: #{deepset_flattened_forward.1} parent=1 // pred_check_branch
      %241 = sbr.rel (0) target = $region105
    $region104: #{deepset_flattened_forward.1} parent=1 // pred_region
      %242 = dma.done [#allocation8], 1024
    $region105: #{deepset_flattened_forward.1} parent=1 // pred_fallthru
      _
    // Predicated region
    $region106: #{deepset_flattened_forward.1} parent=1 // pred_check
      _
    $region107: #{deepset_flattened_forward.1} parent=1 // pred_check_branch
      %244 = sbr.rel (0) target = $region109
    $region108: #{deepset_flattened_forward.1} parent=1 // pred_region
      %245 = dma.done [#allocation8], 16
    $region109: #{deepset_flattened_forward.1} parent=1 // pred_fallthru
      _
    // Predicated region
    $region110: #{deepset_flattened_forward.1} parent=1 // pred_check
      _
    $region111: #{deepset_flattened_forward.1} parent=1 // pred_check_branch
      %247 = sbr.rel (0) target = $region113
    $region112: #{deepset_flattened_forward.1} parent=1 // pred_region
      %248 = dma.done [#allocation11], 1024
    $region113: #{deepset_flattened_forward.1} parent=1 // pred_fallthru
      _
    // Predicated region
    $region114: #{deepset_flattened_forward.1} parent=1 // pred_check
      _
    $region115: #{deepset_flattened_forward.1} parent=1 // pred_check_branch
      %250 = sbr.rel (0) target = $region117
    $region116: #{deepset_flattened_forward.1} parent=1 // pred_region
      %251 = dma.done [#allocation11], 32
    $region117: #{deepset_flattened_forward.1} parent=1 // pred_fallthru
      _
    // Predicated region
    $region118: #{deepset_flattened_forward.1} parent=1 // pred_check
      _
    $region119: #{deepset_flattened_forward.1} parent=1 // pred_check_branch
      %253 = sbr.rel (0) target = $region121
    $region120: #{deepset_flattened_forward.1} parent=1 // pred_region
      %254 = dma.done [#allocation14], 32
    $region121: #{deepset_flattened_forward.1} parent=1 // pred_fallthru
      _
    // Predicated region
    $region122: #{deepset_flattened_forward.1} parent=1 // pred_check
      _
    $region123: #{deepset_flattened_forward.1} parent=1 // pred_check_branch
      %256 = sbr.rel (0) target = $region125
    $region124: #{deepset_flattened_forward.1} parent=1 // pred_region
      %257 = dma.done [#allocation14], 32
    $region125: #{deepset_flattened_forward.1} parent=1 // pred_fallthru
      _
    // Predicated region
    $region126: #{deepset_flattened_forward.1} parent=1 // pred_check
      _
    $region127: #{deepset_flattened_forward.1} parent=1 // pred_check_branch
      %259 = sbr.rel (0) target = $region129
    $region128: #{deepset_flattened_forward.1} parent=1 // pred_region
      %260 = dma.done [#allocation17], 32
    $region129: #{deepset_flattened_forward.1} parent=1 // pred_fallthru
      _
    // Predicated region
    $region130: #{deepset_flattened_forward.1} parent=1 // pred_check
      _
    $region131: #{deepset_flattened_forward.1} parent=1 // pred_check_branch
      %262 = sbr.rel (0) target = $region133
    $region132: #{deepset_flattened_forward.1} parent=1 // pred_region
      %263 = dma.done [#allocation17], 32
    $region133: #{deepset_flattened_forward.1} parent=1 // pred_fallthru
      _
    // Predicated region
    $region134: #{deepset_flattened_forward.1} parent=1 // pred_check
      _
    $region135: #{deepset_flattened_forward.1} parent=1 // pred_check_branch
      %265 = sbr.rel (0) target = $region137
    $region136: #{deepset_flattened_forward.1} parent=1 // pred_region
      %266 = dma.done [#allocation20], 4096
    $region137: #{deepset_flattened_forward.1} parent=1 // pred_fallthru
      _
    // Predicated region
    $region138: #{deepset_flattened_forward.1} parent=1 // pred_check
      _
    $region139: #{deepset_flattened_forward.1} parent=1 // pred_check_branch
      %268 = sbr.rel (0) target = $region141
    $region140: #{deepset_flattened_forward.1} parent=1 // pred_region
      %269 = dma.done [#allocation20], 16
    $region141: #{deepset_flattened_forward.1} parent=1 // pred_fallthru
      _
    // Predicated region
    $region142: #{deepset_flattened_forward.1} parent=1 // pred_check
      _
    $region143: #{deepset_flattened_forward.1} parent=1 // pred_check_branch
      %271 = sbr.rel (0) target = $region145
    $region144: #{deepset_flattened_forward.1} parent=1 // pred_region
      %272 = dma.done [#allocation23], 16
    $region145: #{deepset_flattened_forward.1} parent=1 // pred_fallthru
      _
    // Predicated region
    $region146: #{deepset_flattened_forward.1} parent=1 // pred_check
      _
    $region147: #{deepset_flattened_forward.1} parent=1 // pred_check_branch
      %274 = sbr.rel (0) target = $region149
    $region148: #{deepset_flattened_forward.1} parent=1 // pred_region
      %275 = dma.done [#allocation23], 16
    $region149: #{deepset_flattened_forward.1} parent=1 // pred_fallthru
      _
    // Predicated region
    $region150: #{deepset_flattened_forward.1} parent=1 // pred_check
      _
    $region151: #{deepset_flattened_forward.1} parent=1 // pred_check_branch
      %277 = sbr.rel (0) target = $region153
    $region152: #{deepset_flattened_forward.1} parent=1 // pred_region
      %278 = dma.done [#allocation26], 16
    $region153: #{deepset_flattened_forward.1} parent=1 // pred_fallthru
      _
    // Predicated region
    $region154: #{deepset_flattened_forward.1} parent=1 // pred_check
      _
    $region155: #{deepset_flattened_forward.1} parent=1 // pred_check_branch
      %280 = sbr.rel (0) target = $region157
    $region156: #{deepset_flattened_forward.1} parent=1 // pred_region
      %281 = dma.done [#allocation26], 16
    $region157: #{deepset_flattened_forward.1} parent=1 // pred_fallthru
      _
    // Predicated region
    $region158: #{deepset_flattened_forward.1} parent=1 // pred_check
      _
    $region159: #{deepset_flattened_forward.1} parent=1 // pred_check_branch
      %283 = sbr.rel (0) target = $region161
    $region160: #{deepset_flattened_forward.1} parent=1 // pred_region
      %284 = dma.done [#allocation29], 16
    $region161: #{deepset_flattened_forward.1} parent=1 // pred_fallthru
      _
    %v285 = vld [vmem:[%s0] sm:$0xff]
    %286 = vadd.xlane.f32.xlu0 %v285
    %v287 = vpop.xlane.xlu0 %286
    %v288 = vmul.f32 %v287, 0.0078125
    %v289 = vld [vmem:[#allocation2] sm:$0x1]
    %v290 = vld [vmem:[#allocation4] sm:$0x1]
    %v291 = vadd.f32 %v289, %v290
    %v293 = vlaneseq
    %v294 = vshrl.u32 %v293, 7
    %v295 = vsub.s32 0, %v294
    %v296 = vrot.slane %v291, %v295
    %v298 = vmul.f32 %v288, %v296
    %v299 = vld [vmem:[#allocation6] sm:$0x1]
    %v301 = vlaneseq
    %v302 = vshrl.u32 %v301, 7
    %v303 = vsub.s32 0, %v302
    %v304 = vrot.slane %v299, %v303
    %v306 = vadd.f32 %v298, %v304
    %v307 = vld [vmem:[#allocation7] sm:$0xff]
    %v308 = vld [vmem:[#allocation7 + $0x8] sm:$0xff]
    %v309 = vld [vmem:[#allocation7 + $0x10] sm:$0xff]
    %v310 = vld [vmem:[#allocation7 + $0x18] sm:$0xff]
    %v311 = vld [vmem:[#allocation7 + $0x20] sm:$0xff]
    %v312 = vld [vmem:[#allocation7 + $0x28] sm:$0xff]
    %v313 = vld [vmem:[#allocation7 + $0x30] sm:$0xff]
    %v314 = vld [vmem:[#allocation7 + $0x38] sm:$0xff]
    %v315 = vld [vmem:[#allocation9] sm:$0x1]
    %v317 = vlaneseq
    %v318 = vshrl.u32 %v317, 7
    %v319 = vsub.s32 0, %v318
    %v320 = vrot.slane %v315, %v319
    %vm322 = vcmask 523264
    %v324 = vsel %vm322, %v306, 0
    %326 = vmatprep.subr.mxu0 0.0
    %327 = vmatpush1.msra.mxu0 %v307
    %328 = vmatprep.subr.mxu0 0.0
    %329 = vmatpush1.msra.mxu0 %v308
    %330 = vmatprep.subr.mxu0 0.0
    %331 = vmatpush1.msra.mxu0 %v309
    %332 = vmatprep.subr.mxu0 0.0
    %333 = vmatpush1.msra.mxu0 %v310
    %334 = vmatprep.subr.mxu0 0.0
    %335 = vmatpush1.msra.mxu0 %v311
    %336 = vmatprep.subr.mxu0 0.0
    %337 = vmatpush1.msra.mxu0 %v312
    %338 = vmatprep.subr.mxu0 0.0
    %339 = vmatpush1.msra.mxu0 %v313
    %340 = vmatprep.subr.mxu0 0.0
    %341 = vmatpush1.msra.mxu0 %v314
    %342 = vmatprep.subr.mxu0 0.0
    %343 = vmatpush1.msra.mxu0 0.0
    %344 = vmatprep.subr.mxu0 0.0
    %345 = vmatpush1.msra.mxu0 0.0
    %346 = vmatprep.subr.mxu0 0.0
    %347 = vmatpush1.msra.mxu0 0.0
    %348 = vmatprep.subr.mxu0 0.0
    %349 = vmatpush1.msra.mxu0 0.0
    %350 = vmatprep.subr.mxu0 0.0
    %351 = vmatpush1.msra.mxu0 0.0
    %352 = vmatprep.subr.mxu0 0.0
    %353 = vmatpush1.msra.mxu0 0.0
    %354 = vmatprep.subr.mxu0 0.0
    %355 = vmatpush1.msra.mxu0 0.0
    %356 = vmatprep.subr.mxu0 0.0
    %357 = vmatpush1.msra.mxu0 0.0
    %358 = vmatprep.subr.mxu0 0.0
    %359 = vmatpush1.msra.mxu0 0.0
    %360 = vmatprep.subr.mxu0 0.0
    %361 = vmatpush1.msra.mxu0 0.0
    %362 = vmatprep.subr.mxu0 0.0
    %363 = vmatpush1.msra.mxu0 0.0
    %364 = vmatprep.subr.mxu0 0.0
    %365 = vmatpush1.msra.mxu0 0.0
    %366 = vmatprep.subr.mxu0 0.0
    %367 = vmatpush1.msra.mxu0 0.0
    %368 = vmatprep.subr.mxu0 0.0
    %369 = vmatpush1.msra.mxu0 0.0
    %370 = vmatprep.subr.mxu0 0.0
    %371 = vmatpush1.msra.mxu0 0.0
    %372 = vmatprep.subr.mxu0 0.0
    %373 = vmatpush1.msra.mxu0 0.0
    %374 = vmatprep.subr.mxu0 0.0
    %375 = vmatpush1.msra.mxu0 0.0
    %376 = vmatprep.subr.mxu0 0.0
    %377 = vmatpush1.msra.mxu0 0.0
    %378 = vmatprep.subr.mxu0 0.0
    %379 = vmatpush1.msra.mxu0 0.0
    %380 = vmatprep.subr.mxu0 0.0
    %381 = vmatpush1.msra.mxu0 0.0
    %382 = vmatprep.subr.mxu0 0.0
    %383 = vmatpush1.msra.mxu0 0.0
    %384 = vmatprep.subr.mxu0 0.0
    %385 = vmatpush1.msra.mxu0 0.0
    %386 = vmatprep.subr.mxu0 0.0
    %387 = vmatpush1.msra.mxu0 0.0
    %388 = vmatprep.subr.mxu0 0.0
    %389 = vmatpush1.msra.mxu0 0.0
    %390 = vmatprep.mubr.f32.mxu0 0.0
    %391 = vmatmul.mubr.f32.gmra.mrb[0].mxu0 %v324
    %v392 = vpop.f32.mrb[0].mxu0
    %v393 = vadd.f32 %v320, %v392
    %v394 = vpop.f32.mrb[0].mxu0
    %395 = vdwg.mxu0
    %v396 = vld [vmem:[%s7] sm:$0xff]
    %v397 = vld [vmem:[%s7 + $0x8] sm:$0xff]
    %v398 = vld [vmem:[%s7 + $0x10] sm:$0xff]
    %v399 = vld [vmem:[%s7 + $0x18] sm:$0xff]
    %v400 = vld [vmem:[%s7 + $0x20] sm:$0xff]
    %v401 = vld [vmem:[%s7 + $0x28] sm:$0xff]
    %v402 = vld [vmem:[%s7 + $0x30] sm:$0xff]
    %v403 = vld [vmem:[%s7 + $0x38] sm:$0xff]
    %v404 = vld [vmem:[%s7 + $0x40] sm:$0xff]
    %v405 = vld [vmem:[%s7 + $0x48] sm:$0xff]
    %v406 = vld [vmem:[%s7 + $0x50] sm:$0xff]
    %v407 = vld [vmem:[%s7 + $0x58] sm:$0xff]
    %v408 = vld [vmem:[%s7 + $0x60] sm:$0xff]
    %v409 = vld [vmem:[%s7 + $0x68] sm:$0xff]
    %v410 = vld [vmem:[%s7 + $0x70] sm:$0xff]
    %v411 = vld [vmem:[%s7 + $0x78] sm:$0xff]
    %v412 = vld [vmem:[%s7 + $0x80] sm:$0xff]
    %v413 = vld [vmem:[%s7 + $0x88] sm:$0xff]
    %v414 = vld [vmem:[%s7 + $0x90] sm:$0xff]
    %v415 = vld [vmem:[%s7 + $0x98] sm:$0xff]
    %v416 = vld [vmem:[%s7 + $0xa0] sm:$0xff]
    %v417 = vld [vmem:[%s7 + $0xa8] sm:$0xff]
    %v418 = vld [vmem:[%s7 + $0xb0] sm:$0xff]
    %v419 = vld [vmem:[%s7 + $0xb8] sm:$0xff]
    %v420 = vld [vmem:[%s7 + $0xc0] sm:$0xff]
    %v421 = vld [vmem:[%s7 + $0xc8] sm:$0xff]
    %v422 = vld [vmem:[%s7 + $0xd0] sm:$0xff]
    %v423 = vld [vmem:[%s7 + $0xd8] sm:$0xff]
    %v424 = vld [vmem:[%s7 + $0xe0] sm:$0xff]
    %v425 = vld [vmem:[%s7 + $0xe8] sm:$0xff]
    %v426 = vld [vmem:[%s7 + $0xf0] sm:$0xff]
    %v427 = vld [vmem:[%s7 + $0xf8] sm:$0xff]
    %v428 = vld [vmem:[%s1] sm:$0xff]
    %v429 = vld [vmem:[#allocation10] sm:$0xff]
    %v430 = vld [vmem:[#allocation10 + $0x8] sm:$0xff]
    %v431 = vld [vmem:[#allocation10 + $0x10] sm:$0xff]
    %v432 = vld [vmem:[#allocation10 + $0x18] sm:$0xff]
    %v433 = vld [vmem:[#allocation10 + $0x20] sm:$0xff]
    %v434 = vld [vmem:[#allocation10 + $0x28] sm:$0xff]
    %v435 = vld [vmem:[#allocation10 + $0x30] sm:$0x7]
    %v436 = vld [vmem:[#allocation10 + $0x38] sm:$0x7]
    %vm437 = vcmask 220160
    %v439 = vsel %vm437, %v428, 0
    %vm441 = vcmask 1042432
    %v443 = vsel %vm441, %v435, 0
    %v446 = vsel %vm441, %v436, 0
    %448 = vmatprep.subr.mxu0 %v430
    %449 = vmatpush1.msra.mxu0 %v429
    %450 = vmatprep.subr.mxu0 %v432
    %451 = vmatpush1.msra.mxu0 %v431
    %452 = vmatprep.subr.mxu0 %v434
    %453 = vmatpush1.msra.mxu0 %v433
    %454 = vmatprep.subr.mxu0 %v446
    %455 = vmatpush1.msra.mxu0 %v443
    %456 = vmatprep.subr.mxu0 0.0
    %457 = vmatpush1.msra.mxu0 0.0
    %458 = vmatprep.subr.mxu0 0.0
    %459 = vmatpush1.msra.mxu0 0.0
    %460 = vmatprep.subr.mxu0 0.0
    %461 = vmatpush1.msra.mxu0 0.0
    %462 = vmatprep.subr.mxu0 0.0
    %463 = vmatpush1.msra.mxu0 0.0
    %464 = vmatprep.subr.mxu0 0.0
    %465 = vmatpush1.msra.mxu0 0.0
    %466 = vmatprep.subr.mxu0 0.0
    %467 = vmatpush1.msra.mxu0 0.0
    %468 = vmatprep.subr.mxu0 0.0
    %469 = vmatpush1.msra.mxu0 0.0
    %470 = vmatprep.subr.mxu0 0.0
    %471 = vmatpush1.msra.mxu0 0.0
    %472 = vmatprep.subr.mxu0 0.0
    %473 = vmatpush1.msra.mxu0 0.0
    %474 = vmatprep.subr.mxu0 0.0
    %475 = vmatpush1.msra.mxu0 0.0
    %476 = vmatprep.subr.mxu0 0.0
    %477 = vmatpush1.msra.mxu0 0.0
    %478 = vmatprep.subr.mxu0 0.0
    %479 = vmatpush1.msra.mxu0 0.0
    %480 = vmatprep.subr.mxu0 0.0
    %481 = vmatpush1.msra.mxu0 0.0
    %482 = vmatprep.subr.mxu0 0.0
    %483 = vmatpush1.msra.mxu0 0.0
    %484 = vmatprep.subr.mxu0 0.0
    %485 = vmatpush1.msra.mxu0 0.0
    %486 = vmatprep.subr.mxu0 0.0
    %487 = vmatpush1.msra.mxu0 0.0
    %488 = vmatprep.subr.mxu0 0.0
    %489 = vmatpush1.msra.mxu0 0.0
    %490 = vmatprep.subr.mxu0 0.0
    %491 = vmatpush1.msra.mxu0 0.0
    %492 = vmatprep.subr.mxu0 0.0
    %493 = vmatpush1.msra.mxu0 0.0
    %494 = vmatprep.subr.mxu0 0.0
    %495 = vmatpush1.msra.mxu0 0.0
    %496 = vmatprep.subr.mxu0 0.0
    %497 = vmatpush1.msra.mxu0 0.0
    %498 = vmatprep.subr.mxu0 0.0
    %499 = vmatpush1.msra.mxu0 0.0
    %500 = vmatprep.subr.mxu0 0.0
    %501 = vmatpush1.msra.mxu0 0.0
    %502 = vmatprep.subr.mxu0 0.0
    %503 = vmatpush1.msra.mxu0 0.0
    %504 = vmatprep.subr.mxu0 0.0
    %505 = vmatpush1.msra.mxu0 0.0
    %506 = vmatprep.subr.mxu0 0.0
    %507 = vmatpush1.msra.mxu0 0.0
    %508 = vmatprep.subr.mxu0 0.0
    %509 = vmatpush1.msra.mxu0 0.0
    %510 = vmatprep.subr.mxu0 0.0
    %511 = vmatpush1.msra.mxu0 0.0
    %512 = vmatprep.mubr.f32.mxu0 0.0
    %513 = vmatmul.mubr.f32.gmra.mrb[0].mxu0 %v439
    %v514 = vpop.f32.mrb[0].mxu0
    %v515 = vadd.f32 0.0, %v514
    %v516 = vpop.f32.mrb[0].mxu0
    %v517 = vadd.f32 0.0, %v516
    %518 = vdwg.mxu0
    %519 = vmatprep.subr.mxu0 %v397
    %520 = vmatpush1.msra.mxu0 %v396
    %521 = vmatprep.subr.mxu0 %v399
    %522 = vmatpush1.msra.mxu0 %v398
    %523 = vmatprep.subr.mxu0 %v401
    %524 = vmatpush1.msra.mxu0 %v400
    %525 = vmatprep.subr.mxu0 %v403
    %526 = vmatpush1.msra.mxu0 %v402
    %527 = vmatprep.subr.mxu0 %v405
    %528 = vmatpush1.msra.mxu0 %v404
    %529 = vmatprep.subr.mxu0 %v407
    %530 = vmatpush1.msra.mxu0 %v406
    %531 = vmatprep.subr.mxu0 %v409
    %532 = vmatpush1.msra.mxu0 %v408
    %533 = vmatprep.subr.mxu0 %v411
    %534 = vmatpush1.msra.mxu0 %v410
    %535 = vmatprep.subr.mxu0 %v413
    %536 = vmatpush1.msra.mxu0 %v412
    %537 = vmatprep.subr.mxu0 %v415
    %538 = vmatpush1.msra.mxu0 %v414
    %539 = vmatprep.subr.mxu0 %v417
    %540 = vmatpush1.msra.mxu0 %v416
    %541 = vmatprep.subr.mxu0 %v419
    %542 = vmatpush1.msra.mxu0 %v418
    %543 = vmatprep.subr.mxu0 %v421
    %544 = vmatpush1.msra.mxu0 %v420
    %545 = vmatprep.subr.mxu0 %v423
    %546 = vmatpush1.msra.mxu0 %v422
    %547 = vmatprep.subr.mxu0 %v425
    %548 = vmatpush1.msra.mxu0 %v424
    %549 = vmatprep.subr.mxu0 %v427
    %550 = vmatpush1.msra.mxu0 %v426
    %551 = vmatprep.subr.mxu0 0.0
    %552 = vmatpush1.msra.mxu0 0.0
    %553 = vmatprep.subr.mxu0 0.0
    %554 = vmatpush1.msra.mxu0 0.0
    %555 = vmatprep.subr.mxu0 0.0
    %556 = vmatpush1.msra.mxu0 0.0
    %557 = vmatprep.subr.mxu0 0.0
    %558 = vmatpush1.msra.mxu0 0.0
    %559 = vmatprep.subr.mxu0 0.0
    %560 = vmatpush1.msra.mxu0 0.0
    %561 = vmatprep.subr.mxu0 0.0
    %562 = vmatpush1.msra.mxu0 0.0
    %563 = vmatprep.subr.mxu0 0.0
    %564 = vmatpush1.msra.mxu0 0.0
    %565 = vmatprep.subr.mxu0 0.0
    %566 = vmatpush1.msra.mxu0 0.0
    %567 = vmatprep.subr.mxu0 0.0
    %568 = vmatpush1.msra.mxu0 0.0
    %569 = vmatprep.subr.mxu0 0.0
    %570 = vmatpush1.msra.mxu0 0.0
    %571 = vmatprep.subr.mxu0 0.0
    %572 = vmatpush1.msra.mxu0 0.0
    %573 = vmatprep.subr.mxu0 0.0
    %574 = vmatpush1.msra.mxu0 0.0
    %575 = vmatprep.subr.mxu0 0.0
    %576 = vmatpush1.msra.mxu0 0.0
    %577 = vmatprep.subr.mxu0 0.0
    %578 = vmatpush1.msra.mxu0 0.0
    %579 = vmatprep.subr.mxu0 0.0
    %580 = vmatpush1.msra.mxu0 0.0
    %581 = vmatprep.subr.mxu0 0.0
    %582 = vmatpush1.msra.mxu0 0.0
    %583 = vmatprep.mubr.f32.mxu0 0.0
    %584 = vmatmul.mubr.f32.gmra.mrb[0].mxu0 %v393
    %v585 = vpop.f32.mrb[0].mxu0
    %v586 = vadd.f32 %v515, %v585
    %v587 = vpop.f32.mrb[0].mxu0
    %v588 = vadd.f32 %v517, %v587
    %589 = vdwg.mxu0
    %v590 = vld [vmem:[#allocation12] sm:$0x3]
    %v592 = vlaneseq
    %v593 = vshrl.u32 %v592, 7
    %v594 = vsub.s32 0, %v593
    %v595 = vrot.slane %v590, %v594
    %v596 = vlaneseq
    %v597 = vshrl.u32 %v596, 7
    %v598 = vsub.s32 1, %v597
    %v599 = vrot.slane %v590, %v598
    %v602 = vadd.f32 %v586, %v595
    %v603 = vadd.f32 %v588, %v599
    %v604 = vld [vmem:[#allocation13] sm:$0x3]
    %v605 = vld [vmem:[#allocation18] sm:$0x3]
    %v606 = vadd.f32 %v605, 1e-05
    %v607 = vrsqrt.pop %v606
    %v608 = vmul.f32 %v604, %v607
    %v609 = vld [vmem:[#allocation16] sm:$0x3]
    %v611 = vlaneseq
    %v612 = vshrl.u32 %v611, 7
    %v613 = vsub.s32 0, %v612
    %v614 = vrot.slane %v609, %v613
    %v615 = vlaneseq
    %v616 = vshrl.u32 %v615, 7
    %v617 = vsub.s32 1, %v616
    %v618 = vrot.slane %v609, %v617
    %v621 = vsub.f32 %v602, %v614
    %v622 = vsub.f32 %v603, %v618
    %v624 = vlaneseq
    %v625 = vshrl.u32 %v624, 7
    %v626 = vsub.s32 0, %v625
    %v627 = vrot.slane %v608, %v626
    %v628 = vlaneseq
    %v629 = vshrl.u32 %v628, 7
    %v630 = vsub.s32 1, %v629
    %v631 = vrot.slane %v608, %v630
    %v634 = vmul.f32 %v621, %v627
    %v635 = vmul.f32 %v622, %v631
    %v636 = vld [vmem:[#allocation15] sm:$0x3]
    %v638 = vlaneseq
    %v639 = vshrl.u32 %v638, 7
    %v640 = vsub.s32 0, %v639
    %v641 = vrot.slane %v636, %v640
    %v642 = vlaneseq
    %v643 = vshrl.u32 %v642, 7
    %v644 = vsub.s32 1, %v643
    %v645 = vrot.slane %v636, %v644
    %v648 = vadd.f32 %v634, %v641
    %v649 = vadd.f32 %v635, %v645
    %v650 = vmax.f32 %v648, 0.0
    %v651 = vmax.f32 %v649, 0.0
    %v652 = vld [vmem:[#allocation19] sm:$0xff]
    %v653 = vld [vmem:[#allocation19 + $0x8] sm:$0xff]
    %v654 = vld [vmem:[#allocation19 + $0x10] sm:$0xff]
    %v655 = vld [vmem:[#allocation19 + $0x18] sm:$0xff]
    %v656 = vld [vmem:[#allocation19 + $0x20] sm:$0xff]
    %v657 = vld [vmem:[#allocation19 + $0x28] sm:$0xff]
    %v658 = vld [vmem:[#allocation19 + $0x30] sm:$0xff]
    %v659 = vld [vmem:[#allocation19 + $0x38] sm:$0xff]
    %v660 = vld [vmem:[#allocation19 + $0x40] sm:$0xff]
    %v661 = vld [vmem:[#allocation19 + $0x48] sm:$0xff]
    %v662 = vld [vmem:[#allocation19 + $0x50] sm:$0xff]
    %v663 = vld [vmem:[#allocation19 + $0x58] sm:$0xff]
    %v664 = vld [vmem:[#allocation19 + $0x60] sm:$0xff]
    %v665 = vld [vmem:[#allocation19 + $0x68] sm:$0xff]
    %v666 = vld [vmem:[#allocation19 + $0x70] sm:$0xff]
    %v667 = vld [vmem:[#allocation19 + $0x78] sm:$0xff]
    %v668 = vld [vmem:[#allocation19 + $0x80] sm:$0xff]
    %v669 = vld [vmem:[#allocation19 + $0x88] sm:$0xff]
    %v670 = vld [vmem:[#allocation19 + $0x90] sm:$0xff]
    %v671 = vld [vmem:[#allocation19 + $0x98] sm:$0xff]
    %v672 = vld [vmem:[#allocation19 + $0xa0] sm:$0xff]
    %v673 = vld [vmem:[#allocation19 + $0xa8] sm:$0xff]
    %v674 = vld [vmem:[#allocation19 + $0xb0] sm:$0xff]
    %v675 = vld [vmem:[#allocation19 + $0xb8] sm:$0xff]
    %v676 = vld [vmem:[#allocation19 + $0xc0] sm:$0xff]
    %v677 = vld [vmem:[#allocation19 + $0xc8] sm:$0xff]
    %v678 = vld [vmem:[#allocation19 + $0xd0] sm:$0xff]
    %v679 = vld [vmem:[#allocation19 + $0xd8] sm:$0xff]
    %v680 = vld [vmem:[#allocation19 + $0xe0] sm:$0xff]
    %v681 = vld [vmem:[#allocation19 + $0xe8] sm:$0xff]
    %v682 = vld [vmem:[#allocation19 + $0xf0] sm:$0xff]
    %v683 = vld [vmem:[#allocation19 + $0xf8] sm:$0xff]
    %v684 = vld [vmem:[#allocation21] sm:$0x1]
    %v686 = vlaneseq
    %v687 = vshrl.u32 %v686, 7
    %v688 = vsub.s32 0, %v687
    %v689 = vrot.slane %v684, %v688
    %691 = vmatprep.subr.mxu0 0.0
    %692 = vmatpush1.msra.mxu0 %v652
    %693 = vmatprep.subr.mxu0 0.0
    %694 = vmatpush1.msra.mxu0 %v653
    %695 = vmatprep.subr.mxu0 0.0
    %696 = vmatpush1.msra.mxu0 %v654
    %697 = vmatprep.subr.mxu0 0.0
    %698 = vmatpush1.msra.mxu0 %v655
    %699 = vmatprep.subr.mxu0 0.0
    %700 = vmatpush1.msra.mxu0 %v656
    %701 = vmatprep.subr.mxu0 0.0
    %702 = vmatpush1.msra.mxu0 %v657
    %703 = vmatprep.subr.mxu0 0.0
    %704 = vmatpush1.msra.mxu0 %v658
    %705 = vmatprep.subr.mxu0 0.0
    %706 = vmatpush1.msra.mxu0 %v659
    %707 = vmatprep.subr.mxu0 0.0
    %708 = vmatpush1.msra.mxu0 %v660
    %709 = vmatprep.subr.mxu0 0.0
    %710 = vmatpush1.msra.mxu0 %v661
    %711 = vmatprep.subr.mxu0 0.0
    %712 = vmatpush1.msra.mxu0 %v662
    %713 = vmatprep.subr.mxu0 0.0
    %714 = vmatpush1.msra.mxu0 %v663
    %715 = vmatprep.subr.mxu0 0.0
    %716 = vmatpush1.msra.mxu0 %v664
    %717 = vmatprep.subr.mxu0 0.0
    %718 = vmatpush1.msra.mxu0 %v665
    %719 = vmatprep.subr.mxu0 0.0
    %720 = vmatpush1.msra.mxu0 %v666
    %721 = vmatprep.subr.mxu0 0.0
    %722 = vmatpush1.msra.mxu0 %v667
    %723 = vmatprep.subr.mxu0 0.0
    %724 = vmatpush1.msra.mxu0 %v668
    %725 = vmatprep.subr.mxu0 0.0
    %726 = vmatpush1.msra.mxu0 %v669
    %727 = vmatprep.subr.mxu0 0.0
    %728 = vmatpush1.msra.mxu0 %v670
    %729 = vmatprep.subr.mxu0 0.0
    %730 = vmatpush1.msra.mxu0 %v671
    %731 = vmatprep.subr.mxu0 0.0
    %732 = vmatpush1.msra.mxu0 %v672
    %733 = vmatprep.subr.mxu0 0.0
    %734 = vmatpush1.msra.mxu0 %v673
    %735 = vmatprep.subr.mxu0 0.0
    %736 = vmatpush1.msra.mxu0 %v674
    %737 = vmatprep.subr.mxu0 0.0
    %738 = vmatpush1.msra.mxu0 %v675
    %739 = vmatprep.subr.mxu0 0.0
    %740 = vmatpush1.msra.mxu0 %v676
    %741 = vmatprep.subr.mxu0 0.0
    %742 = vmatpush1.msra.mxu0 %v677
    %743 = vmatprep.subr.mxu0 0.0
    %744 = vmatpush1.msra.mxu0 %v678
    %745 = vmatprep.subr.mxu0 0.0
    %746 = vmatpush1.msra.mxu0 %v679
    %747 = vmatprep.subr.mxu0 0.0
    %748 = vmatpush1.msra.mxu0 %v680
    %749 = vmatprep.subr.mxu0 0.0
    %750 = vmatpush1.msra.mxu0 %v681
    %751 = vmatprep.subr.mxu0 0.0
    %752 = vmatpush1.msra.mxu0 %v682
    %753 = vmatprep.subr.mxu0 0.0
    %754 = vmatpush1.msra.mxu0 %v683
    %755 = vmatprep.mubr.f32.mxu0 %v651
    %756 = vmatmul.mubr.f32.gmra.mrb[0].mxu0 %v650
    %v757 = vpop.f32.mrb[0].mxu0
    %v758 = vadd.f32 %v689, %v757
    %v759 = vpop.f32.mrb[0].mxu0
    %760 = vdwg.mxu0
    %v761 = vld [vmem:[#allocation22] sm:$0x1]
    %v762 = vld [vmem:[#allocation27] sm:$0x1]
    %v763 = vadd.f32 %v762, 1e-05
    %v764 = vrsqrt.pop %v763
    %v765 = vmul.f32 %v761, %v764
    %v766 = vld [vmem:[#allocation25] sm:$0x1]
    %v768 = vlaneseq
    %v769 = vshrl.u32 %v768, 7
    %v770 = vsub.s32 0, %v769
    %v771 = vrot.slane %v766, %v770
    %v773 = vsub.f32 %v758, %v771
    %v775 = vlaneseq
    %v776 = vshrl.u32 %v775, 7
    %v777 = vsub.s32 0, %v776
    %v778 = vrot.slane %v765, %v777
    %v780 = vmul.f32 %v773, %v778
    %v781 = vld [vmem:[#allocation24] sm:$0x1]
    %v783 = vlaneseq
    %v784 = vshrl.u32 %v783, 7
    %v785 = vsub.s32 0, %v784
    %v786 = vrot.slane %v781, %v785
    %v788 = vadd.f32 %v780, %v786
    %v789 = vmax.f32 %v788, 0.0
    %v790 = vld [vmem:[%s20] sm:$0xff]
    %v791 = vld [vmem:[%s20 + $0x8] sm:$0xff]
    %v792 = vld [vmem:[%s20 + $0x10] sm:$0xff]
    %v793 = vld [vmem:[%s20 + $0x18] sm:$0xff]
    %v794 = vld [vmem:[%s20 + $0x20] sm:$0xff]
    %v795 = vld [vmem:[%s20 + $0x28] sm:$0xff]
    %v796 = vld [vmem:[%s20 + $0x30] sm:$0xff]
    %v797 = vld [vmem:[%s20 + $0x38] sm:$0xff]
    %v798 = vld [vmem:[%s20 + $0x40] sm:$0xff]
    %v799 = vld [vmem:[%s20 + $0x48] sm:$0xff]
    %v800 = vld [vmem:[%s20 + $0x50] sm:$0xff]
    %v801 = vld [vmem:[%s20 + $0x58] sm:$0xff]
    %v802 = vld [vmem:[%s20 + $0x60] sm:$0xff]
    %v803 = vld [vmem:[%s20 + $0x68] sm:$0xff]
    %v804 = vld [vmem:[%s20 + $0x70] sm:$0xff]
    %v805 = vld [vmem:[%s20 + $0x78] sm:$0xff]
    %v806 = vld [vmem:[#allocation28] sm:$0x1]
    %v808 = vlaneseq
    %v809 = vshrl.u32 %v808, 7
    %v810 = vsub.s32 0, %v809
    %v811 = vrot.slane %v806, %v810
    %813 = vmatprep.subr.mxu0 0.0
    %814 = vmatpush1.msra.mxu0 %v790
    %815 = vmatprep.subr.mxu0 0.0
    %816 = vmatpush1.msra.mxu0 %v791
    %817 = vmatprep.subr.mxu0 0.0
    %818 = vmatpush1.msra.mxu0 %v792
    %819 = vmatprep.subr.mxu0 0.0
    %820 = vmatpush1.msra.mxu0 %v793
    %821 = vmatprep.subr.mxu0 0.0
    %822 = vmatpush1.msra.mxu0 %v794
    %823 = vmatprep.subr.mxu0 0.0
    %824 = vmatpush1.msra.mxu0 %v795
    %825 = vmatprep.subr.mxu0 0.0
    %826 = vmatpush1.msra.mxu0 %v796
    %827 = vmatprep.subr.mxu0 0.0
    %828 = vmatpush1.msra.mxu0 %v797
    %829 = vmatprep.subr.mxu0 0.0
    %830 = vmatpush1.msra.mxu0 %v798
    %831 = vmatprep.subr.mxu0 0.0
    %832 = vmatpush1.msra.mxu0 %v799
    %833 = vmatprep.subr.mxu0 0.0
    %834 = vmatpush1.msra.mxu0 %v800
    %835 = vmatprep.subr.mxu0 0.0
    %836 = vmatpush1.msra.mxu0 %v801
    %837 = vmatprep.subr.mxu0 0.0
    %838 = vmatpush1.msra.mxu0 %v802
    %839 = vmatprep.subr.mxu0 0.0
    %840 = vmatpush1.msra.mxu0 %v803
    %841 = vmatprep.subr.mxu0 0.0
    %842 = vmatpush1.msra.mxu0 %v804
    %843 = vmatprep.subr.mxu0 0.0
    %844 = vmatpush1.msra.mxu0 %v805
    %845 = vmatprep.subr.mxu0 0.0
    %846 = vmatpush1.msra.mxu0 0.0
    %847 = vmatprep.subr.mxu0 0.0
    %848 = vmatpush1.msra.mxu0 0.0
    %849 = vmatprep.subr.mxu0 0.0
    %850 = vmatpush1.msra.mxu0 0.0
    %851 = vmatprep.subr.mxu0 0.0
    %852 = vmatpush1.msra.mxu0 0.0
    %853 = vmatprep.subr.mxu0 0.0
    %854 = vmatpush1.msra.mxu0 0.0
    %855 = vmatprep.subr.mxu0 0.0
    %856 = vmatpush1.msra.mxu0 0.0
    %857 = vmatprep.subr.mxu0 0.0
    %858 = vmatpush1.msra.mxu0 0.0
    %859 = vmatprep.subr.mxu0 0.0
    %860 = vmatpush1.msra.mxu0 0.0
    %861 = vmatprep.subr.mxu0 0.0
    %862 = vmatpush1.msra.mxu0 0.0
    %863 = vmatprep.subr.mxu0 0.0
    %864 = vmatpush1.msra.mxu0 0.0
    %865 = vmatprep.subr.mxu0 0.0
    %866 = vmatpush1.msra.mxu0 0.0
    %867 = vmatprep.subr.mxu0 0.0
    %868 = vmatpush1.msra.mxu0 0.0
    %869 = vmatprep.subr.mxu0 0.0
    %870 = vmatpush1.msra.mxu0 0.0
    %871 = vmatprep.subr.mxu0 0.0
    %872 = vmatpush1.msra.mxu0 0.0
    %873 = vmatprep.subr.mxu0 0.0
    %874 = vmatpush1.msra.mxu0 0.0
    %875 = vmatprep.subr.mxu0 0.0
    %876 = vmatpush1.msra.mxu0 0.0
    %877 = vmatprep.mubr.f32.mxu0 0.0
    %878 = vmatmul.mubr.f32.gmra.mrb[0].mxu0 %v789
    %v879 = vpop.f32.mrb[0].mxu0
    %v880 = vadd.f32 %v811, %v879
    %v881 = vpop.f32.mrb[0].mxu0
    %882 = vdwg.mxu0
    %883 = vst [vmem:[%s22] sm:$0xff] %v880
    // Predicated region
    $region162: #{deepset_flattened_forward.1} parent=1 // pred_check
      _
    $region163: #{deepset_flattened_forward.1} parent=1 // pred_check_branch
      %885 = sbr.rel (0) target = $region165
    $region164: #{deepset_flattened_forward.1} parent=1 // pred_region
      _
    $region165: #{deepset_flattened_forward.1} parent=1 // pred_fallthru
      _
    // Predicated region
    $region166: #{deepset_flattened_forward.1} parent=1 // pred_check
      _
    $region167: #{deepset_flattened_forward.1} parent=1 // pred_check_branch
      %887 = sbr.rel (0) target = $region169
    $region168: #{deepset_flattened_forward.1} parent=1 // pred_region
      _
    $region169: #{deepset_flattened_forward.1} parent=1 // pred_fallthru
      _
    %888 = vsyncpa [#allocation3], 1
    %889 = vsyncpa [#allocation5], 1
    %890 = vsyncpa [#allocation8], 1
    %891 = vsyncpa [#allocation11], 1
    %892 = vsyncpa [#allocation14], 1
    %893 = vsyncpa [#allocation17], 1
    %894 = vsyncpa [#allocation20], 1
    %895 = vsyncpa [#allocation23], 1
    %896 = vsyncpa [#allocation26], 1
    %897 = vsyncpa [#allocation29], 1

</llo_original>
